<compile_context>
chip_gen: v7x
topology: tpu7x:2x2x1
jax: 0.10.0
libtpu: 0.0.40
codegen_flags: <defaults>
</compile_context>

<pallas_src>
import jax
import jax.numpy as jnp
from jax.experimental import pallas as pl
from jax.experimental.pallas import tpu as pltpu

_LANE_CANDIDATES = (8192, 4096, 2048, 1024, 512, 256, 128)
_SMALL_BYTES = 4 * 1024 * 1024          # single-block cutoff (2x in VMEM = 8 MiB)
_TARGET_TILE_BYTES = 2 * 1024 * 1024    # per-buffer tile size for the tiled path


def _identity_kernel(x_ref, o_ref):
    # Pure VMEM passthrough of the current block.
    o_ref[...] = x_ref[...]


def _cost(nbytes: int) -> pl.CostEstimate:
    # Pure bandwidth op: read + write, zero flops.
    return pl.CostEstimate(flops=0, transcendentals=0, bytes_accessed=2 * nbytes)


def identity_pallas(x: jax.Array) -> jax.Array:
    """Identity forward pass (y = x) as a Pallas TPU copy kernel."""
    orig_shape = x.shape
    dtype = x.dtype
    itemsize = x.dtype.itemsize
    n = x.size
    if n == 0:
        return x
    nbytes = n * itemsize

    # ---- Small path: whole array as a single VMEM block, no grid. ----------
    # Block == full array dims waives the (8,128) divisibility rule, so there
    # is no wrapper-side pad or slice (no extra HBM passes).
    if nbytes <= _SMALL_BYTES:
        x2 = x if x.ndim >= 2 else x.reshape((1, -1))
        out = pl.pallas_call(
            _identity_kernel,
            out_shape=jax.ShapeDtypeStruct(x2.shape, dtype),
            in_specs=[pl.BlockSpec(memory_space=pltpu.MemorySpace.VMEM)],
            out_specs=pl.BlockSpec(memory_space=pltpu.MemorySpace.VMEM),
            input_output_aliases={0: 0},
            cost_estimate=_cost(nbytes),
        )(x2)
        return out.reshape(orig_shape)

    # ---- Large path: lane-dense tiled copy. ---------------------------------
    flat = x.reshape(-1)
    lane = next((c for c in _LANE_CANDIDATES if n % c == 0), None)
    n_used = n
    if lane is None:
        # Rare ragged case (total size not a multiple of 128): pad once.
        # TODO(synk): handle the ragged tail with a masked last block instead
        # of a wrapper-side pad/slice round trip.
        lane = 128
        pad = (-n) % lane
        flat = jnp.pad(flat, (0, pad))
        n_used = n + pad

    rows = n_used // lane
    tile_rows = max(8, (_TARGET_TILE_BYTES // (lane * itemsize)) // 8 * 8)
    tile_rows = min(tile_rows, max(8, (rows // 8) * 8))
    slab = flat.reshape(rows, lane)

    out = pl.pallas_call(
        _identity_kernel,
        out_shape=jax.ShapeDtypeStruct((rows, lane), dtype),
        grid_spec=pltpu.PrefetchScalarGridSpec(
            num_scalar_prefetch=0,
            grid=(pl.cdiv(rows, tile_rows),),
            in_specs=[pl.BlockSpec((tile_rows, lane), lambda i: (i, 0))],
            out_specs=pl.BlockSpec((tile_rows, lane), lambda i: (i, 0)),
        ),
        compiler_params=pltpu.CompilerParams(
            dimension_semantics=("parallel",),
        ),
        input_output_aliases={0: 0},
        cost_estimate=_cost(n_used * itemsize),
    )(slab)

    flat_out = out.reshape(-1)
    if n_used != n:
        flat_out = flat_out[:n]
    return flat_out.reshape(orig_shape)


if __name__ == "__main__":
    key = jax.random.PRNGKey(0)
    # Small shape consistent with a MelGAN discriminator feature map: [N, C, T]
    x = jax.random.normal(key, (2, 4, 16), dtype=jnp.float32)

    y = identity_pallas(x)
    jax.block_until_ready(y)

    assert y.shape == x.shape, (y.shape, x.shape)
    assert y.dtype == x.dtype, (y.dtype, x.dtype)
    assert bool(jnp.array_equal(y, x)), "identity mismatch"

    print("KERNEL_OK")
</pallas_src>

<mosaic_0001>
module attributes {stable_mosaic.version = 11 : i64} {
  func.func @_identity_kernel(%arg0: memref<2x4x16xf32, #tpu.memory_space<vmem>>, %arg1: memref<2x4x16xf32, #tpu.memory_space<vmem>>) attributes {dimension_semantics = [], scalar_prefetch = 0 : i64, scratch_operands = 0 : i64, tpu.core_type = #tpu.core_type<tc>} {
    %c0 = arith.constant 0 : index
    %c0_0 = arith.constant 0 : index
    %c0_1 = arith.constant 0 : index
    %0 = vector.load %arg0[%c0, %c0_0, %c0_1] : memref<2x4x16xf32, #tpu.memory_space<vmem>>, vector<2x4x16xf32>
    %c0_2 = arith.constant 0 : index
    %c0_3 = arith.constant 0 : index
    %c0_4 = arith.constant 0 : index
    %1 = vector.load %arg1[%c0_2, %c0_3, %c0_4] : memref<2x4x16xf32, #tpu.memory_space<vmem>>, vector<2x4x16xf32>
    tpu.vector_store %arg1[%c0_2, %c0_3, %c0_4], %0 {strides = array<i32>} : memref<2x4x16xf32, #tpu.memory_space<vmem>>, vector<2x4x16xf32>,
    return
  }
}

</mosaic_0001>

<llo_original>
// kernel: tpu_custom_call.1
$region0: #{tpu_custom_call.1}
  #allocation0 [shape = 'u32[]', space=smem, size = 0x4, offset = 0x4, fixed_abs, tag = 'smem constant byte address 0x4 - core index']
  #allocation1 [shape = 'u32[144,128]{1,0:T(1,128)}', space=vmem, size = 0x12000, scoped, tag = 'internal scratch']
  %s0 = inlined_call_operand.hbm [shape: f32[2,4,16], index: 0, kind: input, shape index: {}, may-alias: {0,1}]
  %s1 = inlined_call_operand.hbm [shape: f32[2,4,16], index: 1, kind: output, shape index: {}, may-alias: {0,1}]
  %s2 = sld [smem:[#allocation0]]
  $region18: #{tpu_custom_call.1} parent=0
    _
  %s4 = ssub.s32 1, %s2
  %s5 = scalar_select 0, %s4, %s2
  $region1: #{tpu_custom_call.1} parent=0
    #allocation2 [shape = 'u8[4096]{0}', space=vmem, size = 0x1000, scoped, tag = 'input window, operand 0, single buffered']
    #allocation3 [shape = 's32[1]{0}', space=sflag, size = 0x4, scoped, tag = 'scoped memory for tpu_custom_call.1']
    #allocation4 [shape = 's32[1]{0}', space=sflag, size = 0x4, scoped, tag = 'scoped memory for tpu_custom_call.1']
    #allocation5 [shape = 'u8[4096]{0}', space=vmem, size = 0x1000, scoped, tag = 'output window, operand 0, single buffered']
    %6 = vsyncpa [#allocation3], 0
    %7 = vsyncpa [#allocation4], 0
    // Predicated region
    $region2: #{tpu_custom_call.1} parent=1 // pred_check
      _
    $region3: #{tpu_custom_call.1} parent=1 // pred_check_branch
      %9 = sbr.rel (0) target = $region5
    $region4: #{tpu_custom_call.1} parent=1 // pred_region
      %s11 = ssub.s32 128, 128
      %12 = vsyncadd [#allocation3], %s11
      %s13 = sshll.u32 [#allocation2], 4
      %s14 = int_to_ptr.vmem [resolvable:$true] %s13
      %19 = dma.hbm_to_vmem [thread:$0]  %s0, 128, %s14, [#allocation3], 64, 64, 4
    $region5: #{tpu_custom_call.1} parent=1 // pred_fallthru
      _
    // Predicated region
    $region6: #{tpu_custom_call.1} parent=1 // pred_check
      _
    $region7: #{tpu_custom_call.1} parent=1 // pred_check_branch
      %21 = sbr.rel (0) target = $region9
    $region8: #{tpu_custom_call.1} parent=1 // pred_region
      %22 = dma.done [#allocation3], 128
    $region9: #{tpu_custom_call.1} parent=1 // pred_fallthru
      _
    %v23 = vld [vmem:[#allocation2] sm:$0xf]
    %v24 = vld [vmem:[#allocation2 + $0x4] sm:$0xf]
    %vm25 = vcmask 125952
    %26 = vst.msk [vmem:[#allocation5] sm:$0xf] %vm25, %v23
    %27 = vst.msk [vmem:[#allocation5 + $0x4] sm:$0xf] %vm25, %v24
    // Predicated region
    $region10: #{tpu_custom_call.1} parent=1 // pred_check
      _
    $region11: #{tpu_custom_call.1} parent=1 // pred_check_branch
      %29 = sbr.rel (0) target = $region13
    $region12: #{tpu_custom_call.1} parent=1 // pred_region
      %s31 = ssub.s32 128, 128
      %32 = vsyncadd [#allocation4], %s31
      %s33 = sshll.u32 [#allocation5], 4
      %s34 = int_to_ptr.vmem [resolvable:$true] %s33
      %39 = dma.vmem_to_hbm [thread:$0]  %s34, 128, %s1, [#allocation4], 64, 64, 4
    $region13: #{tpu_custom_call.1} parent=1 // pred_fallthru
      _
    // Predicated region
    $region14: #{tpu_custom_call.1} parent=1 // pred_check
      _
    $region15: #{tpu_custom_call.1} parent=1 // pred_check_branch
      %41 = sbr.rel (0) target = $region17
    $region16: #{tpu_custom_call.1} parent=1 // pred_region
      %42 = dma.done [#allocation4], 128
    $region17: #{tpu_custom_call.1} parent=1 // pred_fallthru
      _
    %43 = vsyncpa [#allocation3], 1
    %44 = vsyncpa [#allocation4], 1

</llo_original>
